<compile_context>
chip_gen: v7x
topology: tpu7x:2x2x1
jax: 0.10.0
libtpu: 0.0.40
codegen_flags: <defaults>
</compile_context>

<pallas_src>
import jax
import jax.numpy as jnp
from jax.experimental import pallas as pl
from jax.experimental.pallas import tpu as pltpu

_LANES = 128
_MIN_BYTES_PER_CHUNK = 1 * 1024 * 1024  # only bother chunking >= ~2 MiB tensors


def _make_identity_dma_kernel(n_chunks, chunk_rows):
    """Kernel that copies x_ref -> o_ref entirely with HBM->HBM DMAs."""

    def kernel(x_ref, o_ref, sems):
        if n_chunks == 1:
            cp = pltpu.make_async_copy(x_ref, o_ref, sems.at[0])
            cp.start()
            cp.wait()
            return
        copies = []
        for c in range(n_chunks):
            start = c * chunk_rows  # static per-chunk offset
            cp = pltpu.make_async_copy(
                x_ref.at[pl.ds(start, chunk_rows)],
                o_ref.at[pl.ds(start, chunk_rows)],
                sems.at[c],
            )
            cp.start()  # issue all chunk DMAs so they overlap
            copies.append(cp)
        for cp in copies:
            cp.wait()

    return kernel


def _pick_n_chunks(rows, nbytes):
    """Largest of (4, 2, 1) that divides rows and keeps chunks >= ~1 MiB."""
    if nbytes < 2 * _MIN_BYTES_PER_CHUNK:
        return 1
    for n in (4, 2):
        if rows % n == 0 and nbytes // n >= _MIN_BYTES_PER_CHUNK:
            return n
    return 1


def _identity_dma(x, n_chunks, chunk_rows, nbytes):
    kernel = _make_identity_dma_kernel(n_chunks, chunk_rows)
    return pl.pallas_call(
        kernel,
        out_shape=jax.ShapeDtypeStruct(x.shape, x.dtype),
        in_specs=[pl.BlockSpec(memory_space=pl.ANY)],
        out_specs=pl.BlockSpec(memory_space=pl.ANY),
        scratch_shapes=[pltpu.SemaphoreType.DMA((n_chunks,))],
        cost_estimate=pl.CostEstimate(
            flops=0, transcendentals=0, bytes_accessed=2 * nbytes
        ),
    )(x)


@jax.jit
def dummy_forward(x):
    """Identity forward of Dummy, implemented as a Pallas TPU kernel.

    Accepts any shape/dtype; returns an array equal to x. Data is moved with
    direct HBM->HBM DMAs (no VMEM staging).
    """
    orig_shape = x.shape
    total = 1
    for d in orig_shape:
        total *= d
    itemsize = jnp.dtype(x.dtype).itemsize
    nbytes = total * itemsize

    if total > 0 and total % _LANES == 0:
        # Lane-dense 2D view gives a clean leading axis for chunked DMAs.
        rows = total // _LANES
        x2 = x.reshape(rows, _LANES)
        n_chunks = _pick_n_chunks(rows, nbytes)
        chunk_rows = rows // n_chunks
        out = _identity_dma(x2, n_chunks, chunk_rows, nbytes)
        return out.reshape(orig_shape)

    # Ragged / tiny shapes: single full-ref HBM->HBM DMA on the original
    # shape (DMA has no (8,128) block-shape or VMEM-size constraints).
    return _identity_dma(x, 1, 0, nbytes)


if __name__ == "__main__":
    key = jax.random.PRNGKey(0)
    x = jax.random.normal(key, (2, 4, 16, 16), dtype=jnp.float32)

    y = dummy_forward(x)
    jax.block_until_ready(y)

    assert y.shape == x.shape and y.dtype == x.dtype
    assert bool(jnp.array_equal(y, x))
    print("KERNEL_OK")
</pallas_src>

<mosaic_0001>
module attributes {stable_mosaic.version = 11 : i64} {
  func.func @kernel(%arg0: memref<16x128xf32, #tpu.memory_space<any>>, %arg1: memref<16x128xf32, #tpu.memory_space<any>>, %arg2: memref<1x!tpu.dma_semaphore, #tpu.memory_space<semaphore_mem>>) attributes {dimension_semantics = [], scalar_prefetch = 0 : i64, scratch_operands = 1 : i64, tpu.core_type = #tpu.core_type<tc>} {
    %c0_i32 = arith.constant 0 : i32
    %0 = tpu.memref_slice %arg2[%c0_i32] : memref<1x!tpu.dma_semaphore, #tpu.memory_space<semaphore_mem>> -> memref<1x!tpu.dma_semaphore, #tpu.memory_space<semaphore_mem>>
    %1 = tpu.memref_squeeze %0 : memref<1x!tpu.dma_semaphore, #tpu.memory_space<semaphore_mem>> -> memref<!tpu.dma_semaphore, #tpu.memory_space<semaphore_mem>>
    tpu.enqueue_dma source(%arg0 : memref<16x128xf32, #tpu.memory_space<any>>) target(%arg1 : memref<16x128xf32, #tpu.memory_space<any>>) target_semaphore(%1 : memref<!tpu.dma_semaphore, #tpu.memory_space<semaphore_mem>>)
    %c0_i32_0 = arith.constant 0 : i32
    %2 = tpu.memref_slice %arg2[%c0_i32_0] : memref<1x!tpu.dma_semaphore, #tpu.memory_space<semaphore_mem>> -> memref<1x!tpu.dma_semaphore, #tpu.memory_space<semaphore_mem>>
    %3 = tpu.memref_squeeze %2 : memref<1x!tpu.dma_semaphore, #tpu.memory_space<semaphore_mem>> -> memref<!tpu.dma_semaphore, #tpu.memory_space<semaphore_mem>>
    tpu.wait_dma2 semaphore(%3 : memref<!tpu.dma_semaphore, #tpu.memory_space<semaphore_mem>>) src(%arg0 : memref<16x128xf32, #tpu.memory_space<any>>) dst(%arg1 : memref<16x128xf32, #tpu.memory_space<any>>)
    return
  }
}

</mosaic_0001>

<llo_original>
// kernel: dummy_forward.1
$region0: #{dummy_forward.1}
  #allocation0 [shape = 'u32[]', space=smem, size = 0x4, offset = 0x4, fixed_abs, tag = 'smem constant byte address 0x4 - core index']
  #allocation1 [shape = 'u32[144,128]{1,0:T(1,128)}', space=vmem, size = 0x12000, scoped, tag = 'internal scratch']
  #allocation2 [shape = 's32[1]{0}', space=sflag, size = 0x4, scoped, tag = 'scratch operand']
  #allocation3 [shape = 's32[]', space=sflag, size = 0x4, offset = 0, fixed_abs, tag = 'sflag constant byte address 0x0 - dummy sync flag']
  %s0 = inlined_call_operand.vmem [shape: f32[16,128], index: 0, kind: input, shape index: {}]
  %s1 = inlined_call_operand.vmem [shape: f32[16,128], index: 1, kind: output, shape index: {}]
  %s2 = sld [smem:[#allocation0]]
  $region36: #{dummy_forward.1} parent=0
    _
  %s4 = ssub.s32 1, %s2
  %s5 = scalar_select 0, %s4, %s2
  %p7 = scmp.lt.u32.totalorder 16, 8
  %p8 = pneg %p7
  // Predicated region
  $region2: #{dummy_forward.1} parent=0 // pred_check
    _
  $region3: #{dummy_forward.1} parent=0 // pred_check_branch
    %10 = sbr.rel (%p7) target = $region5
  $region4: #{dummy_forward.1} parent=0 // pred_region
    %s25 = sand.u32 16, 7
    %p26 = scmp.eq.s32.totalorder %s25, 0
    // Predicated region
    $region17: #{dummy_forward.1} parent=4 // pred_check
      %p27 = pneg %p26
    $region18: #{dummy_forward.1} parent=4 // pred_check_branch
      %29 = sbr.rel (%p27) target = $region20
    $region19: #{dummy_forward.1} parent=4 // pred_region
      loop: start=0, step=1, limit=1
      $region21: #{dummy_forward.1} parent=19 // loop_pre_header
        _
      $region22: #{dummy_forward.1} parent=19 // loop_header
        %s31 = sphi 0, %s35
        %p32 = scmp.ge.s32.totalorder %s31, 1
        %s36 = sphi %s0, %s0
        %s37 = sphi %s1, %s1
      $region23: #{dummy_forward.1} parent=19 // loop_header_branch
        %34 = sbr.rel (%p32) target = $region27
      $region24: #{dummy_forward.1} parent=19 // loop_body
        %v38 = vld [vmem:[%s36] sm:$0xff]
        %39 = vst [vmem:[%s37] sm:$0xff] %v38
        %v40 = vld [vmem:[%s36 + $0x8] sm:$0xff]
        %41 = vst [vmem:[%s37 + $0x8] sm:$0xff] %v40
      $region25: #{dummy_forward.1} parent=19 // loop_footer
        %s35 = sadd.s32 1, %s31
      $region26: #{dummy_forward.1} parent=19 // loop_footer_branch
        %30 = sbr.rel target = $region22
      $region27: #{dummy_forward.1} parent=19 // loop_exit
        _
    $region20: #{dummy_forward.1} parent=4 // pred_fallthru
      _
    %p42 = pneg %p26
    // Predicated region
    $region28: #{dummy_forward.1} parent=4 // pred_check
      _
    $region29: #{dummy_forward.1} parent=4 // pred_check_branch
      %44 = sbr.rel (%p26) target = $region31
    $region30: #{dummy_forward.1} parent=4 // pred_region
      %s45 = sand.u32 16, 7
    $region31: #{dummy_forward.1} parent=4 // pred_fallthru
      _
  $region5: #{dummy_forward.1} parent=0 // pred_fallthru
    _
  // Predicated region
  $region6: #{dummy_forward.1} parent=0 // pred_check
    %p11 = pneg %p7
  $region7: #{dummy_forward.1} parent=0 // pred_check_branch
    %13 = sbr.rel (%p11) target = $region9
  $region8: #{dummy_forward.1} parent=0 // pred_region
    %s14 = sshllo.u32 0, 16
    loop: start=0, step=1, limit=1
    $region10: #{dummy_forward.1} parent=8 // loop_pre_header
      _
    $region11: #{dummy_forward.1} parent=8 // loop_header
      %s16 = sphi 0, %s20
      %p17 = scmp.ge.s32.totalorder %s16, 1
      %s21 = sphi %s0, %s0
      %s22 = sphi %s1, %s1
    $region12: #{dummy_forward.1} parent=8 // loop_header_branch
      %19 = sbr.rel (%p17) target = $region16
    $region13: #{dummy_forward.1} parent=8 // loop_body
      %v23 = vld [vmem:[%s21] sm:%s14]
      %24 = vst [vmem:[%s22] sm:%s14] %v23
    $region14: #{dummy_forward.1} parent=8 // loop_footer
      %s20 = sadd.s32 1, %s16
    $region15: #{dummy_forward.1} parent=8 // loop_footer_branch
      %15 = sbr.rel target = $region11
    $region16: #{dummy_forward.1} parent=8 // loop_exit
      _
  $region9: #{dummy_forward.1} parent=0 // pred_fallthru
    _
  // Predicated region
  $region32: #{dummy_forward.1} parent=0 // pred_check
    _
  $region33: #{dummy_forward.1} parent=0 // pred_check_branch
    %48 = sbr.rel (0) target = $region35
  $region34: #{dummy_forward.1} parent=0 // pred_region
    %49 = vsyncadd [#allocation2], 256
  $region35: #{dummy_forward.1} parent=0 // pred_fallthru
    _
  %s50 = smul.u32 16, 1
  %s51 = sshll.u32 %s50, 4
  %52 = dma.done [#allocation2], %s51
  %53 = vsyncmov [#allocation2]
  %s54 = vpop.sfrf %53
  %p55 = scmp.eq.s32.totalorder %s54, 0
  %p56 = pneg %p55
  %58 = shalt.err (%p56)

</llo_original>
